<compile_context>
chip_gen: v7x
topology: tpu7x:2x2x1
jax: 0.10.0
libtpu: 0.0.40
codegen_flags: <defaults>
</compile_context>

<pallas_src>
import math
import functools

import jax
import jax.numpy as jnp
from jax.experimental import pallas as pl
from jax.experimental.pallas import tpu as pltpu


def ppo_kernel(x_ref, w1_ref, b1_ref, w2_ref, b2_ref, w3_ref, b3_ref, o_ref):
    # Load layer1's weight once; it is used twice (forward applies layer1
    # twice) and JAX does not CSE repeated ref loads in the traced body.
    w1 = w1_ref[...]
    cdt = w1.dtype                      # matmul operand dtype (f32 or bf16)
    tb = x_ref.shape[0]
    hidden = w1.shape[1]

    # Hoist the (1, H) -> (TB, H) bias broadcast once (used twice; JAX does
    # not CSE broadcast_in_dim).
    b1 = jnp.broadcast_to(b1_ref[...], (tb, hidden))

    # x is DMA'd in its stored dtype; cast on the VPU here (avoids a separate
    # wrapper-side HBM read+write pass over x).
    x = x_ref[...].astype(cdt)

    # h1 = relu(x @ W1 + b1)
    h = jnp.dot(x, w1, preferred_element_type=jnp.float32) + b1
    h = jnp.maximum(h, 0.0)

    # h2 = relu(h1 @ W1 + b1)   (layer1 applied a second time, as in the module)
    h = jnp.dot(h.astype(cdt), w1, preferred_element_type=jnp.float32) + b1
    h = jnp.maximum(h, 0.0)

    # h3 = relu(h2 @ W2 + b2)
    h = jnp.dot(h.astype(cdt), w2_ref[...],
                preferred_element_type=jnp.float32) + b2_ref[...]
    h = jnp.maximum(h, 0.0)

    # out = h3 @ W3 + b3
    out = jnp.dot(h.astype(cdt), w3_ref[...],
                  preferred_element_type=jnp.float32) + b3_ref[...]
    o_ref[...] = out.astype(o_ref.dtype)


def _choose_block_rows(B):
    """Batch tile: big (amortize per-step overhead), multiple of 8 sublanes,
    capped so the grid has >= 2 steps when the batch allows it (so the
    "parallel" axis can shard across v7x's two TensorCores)."""
    cap = 4096
    b8 = ((B + 7) // 8) * 8
    if b8 < 16:
        return b8                       # tiny batch: a single block
    half = ((pl.cdiv(B, 2) + 7) // 8) * 8
    return min(cap, half)


@functools.partial(jax.jit, static_argnames=("block_rows", "compute_dtype"))
def ppo_forward(x, w1, b1, w2, b2, w3, b3, *, block_rows=None,
                compute_dtype=jnp.bfloat16):
    """x: (B, D_in); w*: (in, out); b*: (1, out). Returns (B, D_out) f32.

    Matmul operands use `compute_dtype` (bf16 default, MXU-native on all
    generations); biases and accumulation are always f32.
    """
    B, D_in = x.shape
    hidden = w1.shape[1]
    D_out = w3.shape[1]

    # forward() applies layer1 twice, so its weight must be square and match x.
    if not (w1.shape[0] == hidden == D_in):
        raise ValueError(
            "PPO.forward applies layer1 twice, so input_layers must equal "
            f"hidden_layer; got x feature dim {D_in} and layer1 weight "
            f"{w1.shape}.")
    if w2.shape != (hidden, hidden) or w3.shape[0] != hidden:
        raise ValueError(
            f"inconsistent layer shapes: w2 {w2.shape}, w3 {w3.shape}")

    # Weight casts are tiny (a few KB), DMA'd once, and stay VMEM-resident.
    w1q = w1.astype(compute_dtype)
    w2q = w2.astype(compute_dtype)
    w3q = w3.astype(compute_dtype)
    # Biases stay f32: they are added to the f32 accumulator.

    b8 = ((B + 7) // 8) * 8
    if block_rows is None:
        TB = _choose_block_rows(B)
    else:
        TB = max(8, ((block_rows + 7) // 8) * 8)
    TB = min(TB, b8)

    grid = (pl.cdiv(B, TB),)            # ragged last tile is boundary-masked

    x_spec = pl.BlockSpec((TB, D_in), lambda i: (i, 0))
    # Direct (TB, D_out) output block: D_out equals the full array's last dim,
    # so this is legal; total output bytes are tiny vs. the x read stream.
    out_spec = pl.BlockSpec((TB, D_out), lambda i: (i, 0))
    # Constant block index -> Pallas keeps these VMEM-resident (no re-DMA).
    resident = lambda a: pl.BlockSpec(a.shape, lambda i: (0,) * a.ndim)

    # TODO(synk): if profiling ever shows exposed DMA at very large TB, sweep
    # pipeline_mode=pl.Buffered(3) on x_spec/out_spec.
    return pl.pallas_call(
        ppo_kernel,
        out_shape=jax.ShapeDtypeStruct((B, D_out), jnp.float32),
        grid=grid,
        in_specs=[
            x_spec,
            resident(w1q), resident(b1),
            resident(w2q), resident(b2),
            resident(w3q), resident(b3),
        ],
        out_specs=out_spec,
        compiler_params=pltpu.CompilerParams(
            dimension_semantics=("parallel",),
            vmem_limit_bytes=32 * 1024 * 1024,
        ),
    )(x, w1q, b1, w2q, b2, w3q, b3)


def init_linear(key, fan_in, fan_out):
    """Deterministic init mimicking nn.Linear's uniform(-1/sqrt(fan_in), ...).
    Returns weight in (in, out) layout and bias as (1, out)."""
    kw, kb = jax.random.split(key)
    bound = 1.0 / math.sqrt(fan_in)
    w = jax.random.uniform(kw, (fan_in, fan_out), jnp.float32, -bound, bound)
    b = jax.random.uniform(kb, (1, fan_out), jnp.float32, -bound, bound)
    return w, b


def _reference(x, w1, b1, w2, b2, w3, b3, compute_dtype=jnp.float32):
    """Pure-JAX reference with the same dtype pipeline as the kernel."""
    relu = lambda a: jnp.maximum(a, 0.0)
    dot = lambda a, w: jnp.dot(a.astype(compute_dtype), w.astype(compute_dtype),
                               preferred_element_type=jnp.float32)
    h = relu(dot(x, w1) + b1)
    h = relu(dot(h, w1) + b1)
    h = relu(dot(h, w2) + b2)
    return dot(h, w3) + b3


if __name__ == "__main__":
    # Shapes consistent with the module:
    #   lanes=4, max_lane_occupancy=8 -> hidden_layer = 32
    #   input_layers must equal hidden_layer (layer1 is applied twice).
    lanes, max_lane_occupancy = 4, 8
    hidden = lanes * max_lane_occupancy          # 32
    input_layers = hidden                        # 32 (required by forward graph)
    output_layers = 8
    batch = 128

    key = jax.random.PRNGKey(0)
    k_x, k1, k2, k3 = jax.random.split(key, 4)

    x = jax.random.normal(k_x, (batch, input_layers), jnp.float32)
    w1, b1 = init_linear(k1, input_layers, hidden)
    w2, b2 = init_linear(k2, hidden, hidden)
    w3, b3 = init_linear(k3, hidden, output_layers)

    # --- f32 operands, explicit small tile (grid of 4 steps), tight tol. ----
    out = ppo_forward(x, w1, b1, w2, b2, w3, b3, block_rows=32,
                      compute_dtype=jnp.float32)
    out = jax.block_until_ready(out)
    ref = _reference(x, w1, b1, w2, b2, w3, b3)
    assert out.shape == (batch, output_layers)
    assert jnp.allclose(out, ref, atol=1e-5, rtol=1e-5), "f32 mismatch"

    # --- default path: bf16 operands, auto tile (TB=64 -> grid of 2). -------
    out_bf16 = ppo_forward(x, w1, b1, w2, b2, w3, b3)
    out_bf16 = jax.block_until_ready(out_bf16)
    ref_bf16 = _reference(x, w1, b1, w2, b2, w3, b3, compute_dtype=jnp.bfloat16)
    assert out_bf16.shape == (batch, output_layers)
    assert jnp.allclose(out_bf16, ref_bf16, atol=2e-3, rtol=2e-3), "bf16 mismatch"

    # --- ragged batch (not a multiple of the tile): masked last block, no pad.
    xr = jax.random.normal(k_x, (100, input_layers), jnp.float32)
    out_r = ppo_forward(xr, w1, b1, w2, b2, w3, b3, compute_dtype=jnp.float32)
    out_r = jax.block_until_ready(out_r)
    ref_r = _reference(xr, w1, b1, w2, b2, w3, b3)
    assert out_r.shape == (100, output_layers)
    assert jnp.allclose(out_r, ref_r, atol=1e-5, rtol=1e-5), "ragged mismatch"

    print("KERNEL_OK")
</pallas_src>

<mosaic_0001>
module attributes {stable_mosaic.version = 11 : i64} {
  func.func @ppo_kernel(%arg0: i32, %arg1: memref<32x32xf32, #tpu.memory_space<vmem>>, %arg2: memref<32x32xf32, #tpu.memory_space<vmem>>, %arg3: memref<1x32xf32, #tpu.memory_space<vmem>>, %arg4: memref<32x32xf32, #tpu.memory_space<vmem>>, %arg5: memref<1x32xf32, #tpu.memory_space<vmem>>, %arg6: memref<32x8xf32, #tpu.memory_space<vmem>>, %arg7: memref<1x8xf32, #tpu.memory_space<vmem>>, %arg8: memref<32x8xf32, #tpu.memory_space<vmem>>) attributes {dimension_semantics = [#tpu.dimension_semantics<parallel>], iteration_bounds = array<i64: 4>, scalar_prefetch = 0 : i64, scratch_operands = 0 : i64, tpu.core_type = #tpu.core_type<tc>, window_params = [{transform_indices = @transform_0, window_bounds = array<i64: 32, 32>}, {pipeline_mode = #tpu.pipeline_mode<synchronous>, transform_indices = @transform_1, window_bounds = array<i64: 32, 32>}, {pipeline_mode = #tpu.pipeline_mode<synchronous>, transform_indices = @transform_2, window_bounds = array<i64: 1, 32>}, {pipeline_mode = #tpu.pipeline_mode<synchronous>, transform_indices = @transform_3, window_bounds = array<i64: 32, 32>}, {pipeline_mode = #tpu.pipeline_mode<synchronous>, transform_indices = @transform_4, window_bounds = array<i64: 1, 32>}, {pipeline_mode = #tpu.pipeline_mode<synchronous>, transform_indices = @transform_5, window_bounds = array<i64: 32, 8>}, {pipeline_mode = #tpu.pipeline_mode<synchronous>, transform_indices = @transform_6, window_bounds = array<i64: 1, 8>}, {transform_indices = @transform_7, window_bounds = array<i64: 32, 8>}]} {
    %c0 = arith.constant 0 : index
    %c0_0 = arith.constant 0 : index
    %0 = vector.load %arg2[%c0, %c0_0] : memref<32x32xf32, #tpu.memory_space<vmem>>, vector<32x32xf32>
    %c0_1 = arith.constant 0 : index
    %c0_2 = arith.constant 0 : index
    %1 = vector.load %arg3[%c0_1, %c0_2] : memref<1x32xf32, #tpu.memory_space<vmem>>, vector<1x32xf32>
    %2 = vector.shape_cast %1 : vector<1x32xf32> to vector<1x32xf32>
    %3 = vector.broadcast %2 : vector<1x32xf32> to vector<32x32xf32>
    %c0_3 = arith.constant 0 : index
    %c0_4 = arith.constant 0 : index
    %4 = vector.load %arg1[%c0_3, %c0_4] : memref<32x32xf32, #tpu.memory_space<vmem>>, vector<32x32xf32>
    %cst = arith.constant dense<0.000000e+00> : vector<32x32xf32>
    %5 = tpu.matmul %4, %0, %cst {dimension_numbers = #tpu.dot_dimension_numbers<[1], [0], [0], [1], [0, 0, 1, 1], [], []>} : vector<32x32xf32>, vector<32x32xf32>, vector<32x32xf32> -> vector<32x32xf32>
    %6 = arith.addf %5, %3 : vector<32x32xf32>
    %cst_5 = arith.constant 0.000000e+00 : f32
    %7 = vector.broadcast %cst_5 : f32 to vector<32x32xf32>
    %8 = arith.maximumf %6, %7 : vector<32x32xf32>
    %cst_6 = arith.constant dense<0.000000e+00> : vector<32x32xf32>
    %9 = tpu.matmul %8, %0, %cst_6 {dimension_numbers = #tpu.dot_dimension_numbers<[1], [0], [0], [1], [0, 0, 1, 1], [], []>} : vector<32x32xf32>, vector<32x32xf32>, vector<32x32xf32> -> vector<32x32xf32>
    %10 = arith.addf %9, %3 : vector<32x32xf32>
    %cst_7 = arith.constant 0.000000e+00 : f32
    %11 = vector.broadcast %cst_7 : f32 to vector<32x32xf32>
    %12 = arith.maximumf %10, %11 : vector<32x32xf32>
    %c0_8 = arith.constant 0 : index
    %c0_9 = arith.constant 0 : index
    %13 = vector.load %arg4[%c0_8, %c0_9] : memref<32x32xf32, #tpu.memory_space<vmem>>, vector<32x32xf32>
    %cst_10 = arith.constant dense<0.000000e+00> : vector<32x32xf32>
    %14 = tpu.matmul %12, %13, %cst_10 {dimension_numbers = #tpu.dot_dimension_numbers<[1], [0], [0], [1], [0, 0, 1, 1], [], []>} : vector<32x32xf32>, vector<32x32xf32>, vector<32x32xf32> -> vector<32x32xf32>
    %c0_11 = arith.constant 0 : index
    %c0_12 = arith.constant 0 : index
    %15 = vector.load %arg5[%c0_11, %c0_12] : memref<1x32xf32, #tpu.memory_space<vmem>>, vector<1x32xf32>
    %16 = vector.broadcast %15 : vector<1x32xf32> to vector<32x32xf32>
    %17 = arith.addf %14, %16 : vector<32x32xf32>
    %cst_13 = arith.constant 0.000000e+00 : f32
    %18 = vector.broadcast %cst_13 : f32 to vector<32x32xf32>
    %19 = arith.maximumf %17, %18 : vector<32x32xf32>
    %c0_14 = arith.constant 0 : index
    %c0_15 = arith.constant 0 : index
    %20 = vector.load %arg6[%c0_14, %c0_15] : memref<32x8xf32, #tpu.memory_space<vmem>>, vector<32x8xf32>
    %cst_16 = arith.constant dense<0.000000e+00> : vector<32x8xf32>
    %21 = tpu.matmul %19, %20, %cst_16 {dimension_numbers = #tpu.dot_dimension_numbers<[1], [0], [0], [1], [0, 0, 1, 1], [], []>} : vector<32x32xf32>, vector<32x8xf32>, vector<32x8xf32> -> vector<32x8xf32>
    %c0_17 = arith.constant 0 : index
    %c0_18 = arith.constant 0 : index
    %22 = vector.load %arg7[%c0_17, %c0_18] : memref<1x8xf32, #tpu.memory_space<vmem>>, vector<1x8xf32>
    %23 = vector.broadcast %22 : vector<1x8xf32> to vector<32x8xf32>
    %24 = arith.addf %21, %23 : vector<32x8xf32>
    %c0_19 = arith.constant 0 : index
    %c0_20 = arith.constant 0 : index
    %25 = vector.load %arg8[%c0_19, %c0_20] : memref<32x8xf32, #tpu.memory_space<vmem>>, vector<32x8xf32>
    tpu.vector_store %arg8[%c0_19, %c0_20], %24 {strides = array<i32>} : memref<32x8xf32, #tpu.memory_space<vmem>>, vector<32x8xf32>,
    return
  }
  func.func @transform_0(%arg0: i32) -> (i32, i32) {
    %c0_i32 = arith.constant 0 : i32
    %c0_i32_0 = arith.constant 0 : i32
    return %arg0, %c0_i32 : i32, i32
  }
  func.func @transform_1(%arg0: i32) -> (i32, i32) {
    %c0_i32 = arith.constant 0 : i32
    %c0_i32_0 = arith.constant 0 : i32
    %c0_i32_1 = arith.constant 0 : i32
    return %c0_i32, %c0_i32_0 : i32, i32
  }
  func.func @transform_2(%arg0: i32) -> (i32, i32) {
    %c0_i32 = arith.constant 0 : i32
    %c0_i32_0 = arith.constant 0 : i32
    %c0_i32_1 = arith.constant 0 : i32
    return %c0_i32, %c0_i32_0 : i32, i32
  }
  func.func @transform_3(%arg0: i32) -> (i32, i32) {
    %c0_i32 = arith.constant 0 : i32
    %c0_i32_0 = arith.constant 0 : i32
    %c0_i32_1 = arith.constant 0 : i32
    return %c0_i32, %c0_i32_0 : i32, i32
  }
  func.func @transform_4(%arg0: i32) -> (i32, i32) {
    %c0_i32 = arith.constant 0 : i32
    %c0_i32_0 = arith.constant 0 : i32
    %c0_i32_1 = arith.constant 0 : i32
    return %c0_i32, %c0_i32_0 : i32, i32
  }
  func.func @transform_5(%arg0: i32) -> (i32, i32) {
    %c0_i32 = arith.constant 0 : i32
    %c0_i32_0 = arith.constant 0 : i32
    %c0_i32_1 = arith.constant 0 : i32
    return %c0_i32, %c0_i32_0 : i32, i32
  }
  func.func @transform_6(%arg0: i32) -> (i32, i32) {
    %c0_i32 = arith.constant 0 : i32
    %c0_i32_0 = arith.constant 0 : i32
    %c0_i32_1 = arith.constant 0 : i32
    return %c0_i32, %c0_i32_0 : i32, i32
  }
  func.func @transform_7(%arg0: i32) -> (i32, i32) {
    %c0_i32 = arith.constant 0 : i32
    %c0_i32_0 = arith.constant 0 : i32
    return %arg0, %c0_i32 : i32, i32
  }
}

</mosaic_0001>

<llo_original>
// kernel: ppo_forward.1
$region0: #{ppo_forward.1}
  #allocation0 [shape = 'u32[]', space=smem, size = 0x4, offset = 0x4, fixed_abs, tag = 'smem constant byte address 0x4 - core index']
  #allocation1 [shape = 'u32[144,128]{1,0:T(1,128)}', space=vmem, size = 0x12000, scoped, tag = 'internal scratch']
  %s0 = inlined_call_operand.vmem [shape: f32[128,32], index: 0, kind: input, shape index: {}]
  %s1 = inlined_call_operand.vmem [shape: f32[32,32], index: 1, kind: input, shape index: {}]
  %s2 = inlined_call_operand.vmem [shape: f32[1,32], index: 2, kind: input, shape index: {}]
  %s3 = inlined_call_operand.vmem [shape: f32[32,32], index: 3, kind: input, shape index: {}]
  %s4 = inlined_call_operand.vmem [shape: f32[1,32], index: 4, kind: input, shape index: {}]
  %s5 = inlined_call_operand.vmem [shape: f32[32,8], index: 5, kind: input, shape index: {}]
  %s6 = inlined_call_operand.vmem [shape: f32[1,8], index: 6, kind: input, shape index: {}]
  %s7 = inlined_call_operand.vmem [shape: f32[128,8], index: 7, kind: output, shape index: {}]
  %s8 = sld [smem:[#allocation0]]
  $region61: #{ppo_forward.1} parent=0
    _
  %s10 = ssub.s32 1, %s8
  %s11 = scalar_select 0, %s10, %s8
  loop: start=0, step=1, limit=6
  $region2: #{ppo_forward.1} parent=0 // loop_pre_header
    _
  $region3: #{ppo_forward.1} parent=0 // loop_header
    %s13 = sphi 0, %s17
    %p14 = scmp.ge.s32.totalorder %s13, 6
    %s23 = sphi 0, %s25
    %s26 = sphi 0, %s23
    %s27 = sphi 0, %s26
    %s43 = sphi 0, %s27
    %s47 = sphi 0, %s47
    %s49 = sphi 0, %s47
    %s50 = sphi 0, %s49
    %s64 = sphi 0, %s50
    %s68 = sphi 0, %s68
    %s70 = sphi 0, %s68
    %s71 = sphi 0, %s70
    %s85 = sphi 0, %s71
    %s89 = sphi 0, %s89
    %s91 = sphi 0, %s89
    %s92 = sphi 0, %s91
    %s106 = sphi 0, %s92
    %s110 = sphi 0, %s110
    %s112 = sphi 0, %s110
    %s113 = sphi 0, %s112
    %s127 = sphi 0, %s113
    %s131 = sphi 0, %s131
    %s133 = sphi 0, %s131
    %s134 = sphi 0, %s133
    %s148 = sphi 0, %s134
    %s152 = sphi 0, %s152
    %s154 = sphi 0, %s152
    %s155 = sphi 0, %s154
    %s169 = sphi 0, %s155
    %s175 = sphi 0, %s177
    %s178 = sphi 0, %s175
    %s179 = sphi 0, %s178
    %s195 = sphi 0, %s179
  $region4: #{ppo_forward.1} parent=0 // loop_header_branch
    %16 = sbr.rel (%p14) target = $region8
  $region5: #{ppo_forward.1} parent=0 // loop_body
    %s18 = ssub.s32 %s13, 1
    %s19 = ssub.s32 %s13, 2
    %s20 = sadd.s32 %s13, 1
    %s21 = ssub.s32 %s13, %s20
    %p22 = scmp.eq.s32.totalorder %s21, 0
    %s24 = sadd.s32 %s23, 1
    %s25 = scalar_select %p22, %s23, %s24
    %p28 = pneg %p22
    %p29 = scmp.eq.s32.totalorder %s13, 3
    %p30 = por %p28, %p29
    %p31 = scmp.ne.s32.totalorder %s23, %s26
    %p32 = scmp.eq.s32.totalorder %s13, 0
    %p33 = por %p31, %p32
    %p34 = scmp.ne.s32.totalorder %s23, %s26
    %p35 = scmp.eq.s32.totalorder %s18, 3
    %p36 = por %p34, %p35
    %p37 = scmp.ne.s32.totalorder %s26, %s27
    %p38 = scmp.eq.s32.totalorder %s18, 0
    %p39 = por %p37, %p38
    %p40 = scmp.ne.s32.totalorder %s26, %s27
    %p41 = scmp.eq.s32.totalorder %s19, 3
    %p42 = por %p40, %p41
    %p44 = scmp.ne.s32.totalorder %s27, %s43
    %p45 = scmp.eq.s32.totalorder %s19, 0
    %p46 = por %p44, %p45
    %s48 = sadd.s32 %s47, 1
    %p51 = scmp.eq.s32.totalorder %s13, 3
    %p52 = scmp.ne.s32.totalorder %s47, %s49
    %p53 = scmp.eq.s32.totalorder %s13, 0
    %p54 = por %p52, %p53
    %p55 = scmp.ne.s32.totalorder %s47, %s49
    %p56 = scmp.eq.s32.totalorder %s18, 3
    %p57 = por %p55, %p56
    %p58 = scmp.ne.s32.totalorder %s49, %s50
    %p59 = scmp.eq.s32.totalorder %s18, 0
    %p60 = por %p58, %p59
    %p61 = scmp.ne.s32.totalorder %s49, %s50
    %p62 = scmp.eq.s32.totalorder %s19, 3
    %p63 = por %p61, %p62
    %p65 = scmp.ne.s32.totalorder %s50, %s64
    %p66 = scmp.eq.s32.totalorder %s19, 0
    %p67 = por %p65, %p66
    %s69 = sadd.s32 %s68, 1
    %p72 = scmp.eq.s32.totalorder %s13, 3
    %p73 = scmp.ne.s32.totalorder %s68, %s70
    %p74 = scmp.eq.s32.totalorder %s13, 0
    %p75 = por %p73, %p74
    %p76 = scmp.ne.s32.totalorder %s68, %s70
    %p77 = scmp.eq.s32.totalorder %s18, 3
    %p78 = por %p76, %p77
    %p79 = scmp.ne.s32.totalorder %s70, %s71
    %p80 = scmp.eq.s32.totalorder %s18, 0
    %p81 = por %p79, %p80
    %p82 = scmp.ne.s32.totalorder %s70, %s71
    %p83 = scmp.eq.s32.totalorder %s19, 3
    %p84 = por %p82, %p83
    %p86 = scmp.ne.s32.totalorder %s71, %s85
    %p87 = scmp.eq.s32.totalorder %s19, 0
    %p88 = por %p86, %p87
    %s90 = sadd.s32 %s89, 1
    %p93 = scmp.eq.s32.totalorder %s13, 3
    %p94 = scmp.ne.s32.totalorder %s89, %s91
    %p95 = scmp.eq.s32.totalorder %s13, 0
    %p96 = por %p94, %p95
    %p97 = scmp.ne.s32.totalorder %s89, %s91
    %p98 = scmp.eq.s32.totalorder %s18, 3
    %p99 = por %p97, %p98
    %p100 = scmp.ne.s32.totalorder %s91, %s92
    %p101 = scmp.eq.s32.totalorder %s18, 0
    %p102 = por %p100, %p101
    %p103 = scmp.ne.s32.totalorder %s91, %s92
    %p104 = scmp.eq.s32.totalorder %s19, 3
    %p105 = por %p103, %p104
    %p107 = scmp.ne.s32.totalorder %s92, %s106
    %p108 = scmp.eq.s32.totalorder %s19, 0
    %p109 = por %p107, %p108
    %s111 = sadd.s32 %s110, 1
    %p114 = scmp.eq.s32.totalorder %s13, 3
    %p115 = scmp.ne.s32.totalorder %s110, %s112
    %p116 = scmp.eq.s32.totalorder %s13, 0
    %p117 = por %p115, %p116
    %p118 = scmp.ne.s32.totalorder %s110, %s112
    %p119 = scmp.eq.s32.totalorder %s18, 3
    %p120 = por %p118, %p119
    %p121 = scmp.ne.s32.totalorder %s112, %s113
    %p122 = scmp.eq.s32.totalorder %s18, 0
    %p123 = por %p121, %p122
    %p124 = scmp.ne.s32.totalorder %s112, %s113
    %p125 = scmp.eq.s32.totalorder %s19, 3
    %p126 = por %p124, %p125
    %p128 = scmp.ne.s32.totalorder %s113, %s127
    %p129 = scmp.eq.s32.totalorder %s19, 0
    %p130 = por %p128, %p129
    %s132 = sadd.s32 %s131, 1
    %p135 = scmp.eq.s32.totalorder %s13, 3
    %p136 = scmp.ne.s32.totalorder %s131, %s133
    %p137 = scmp.eq.s32.totalorder %s13, 0
    %p138 = por %p136, %p137
    %p139 = scmp.ne.s32.totalorder %s131, %s133
    %p140 = scmp.eq.s32.totalorder %s18, 3
    %p141 = por %p139, %p140
    %p142 = scmp.ne.s32.totalorder %s133, %s134
    %p143 = scmp.eq.s32.totalorder %s18, 0
    %p144 = por %p142, %p143
    %p145 = scmp.ne.s32.totalorder %s133, %s134
    %p146 = scmp.eq.s32.totalorder %s19, 3
    %p147 = por %p145, %p146
    %p149 = scmp.ne.s32.totalorder %s134, %s148
    %p150 = scmp.eq.s32.totalorder %s19, 0
    %p151 = por %p149, %p150
    %s153 = sadd.s32 %s152, 1
    %p156 = scmp.eq.s32.totalorder %s13, 3
    %p157 = scmp.ne.s32.totalorder %s152, %s154
    %p158 = scmp.eq.s32.totalorder %s13, 0
    %p159 = por %p157, %p158
    %p160 = scmp.ne.s32.totalorder %s152, %s154
    %p161 = scmp.eq.s32.totalorder %s18, 3
    %p162 = por %p160, %p161
    %p163 = scmp.ne.s32.totalorder %s154, %s155
    %p164 = scmp.eq.s32.totalorder %s18, 0
    %p165 = por %p163, %p164
    %p166 = scmp.ne.s32.totalorder %s154, %s155
    %p167 = scmp.eq.s32.totalorder %s19, 3
    %p168 = por %p166, %p167
    %p170 = scmp.ne.s32.totalorder %s155, %s169
    %p171 = scmp.eq.s32.totalorder %s19, 0
    %p172 = por %p170, %p171
    %s173 = ssub.s32 %s13, %s20
    %p174 = scmp.eq.s32.totalorder %s173, 0
    %s176 = sadd.s32 %s175, 1
    %s177 = scalar_select %p174, %s175, %s176
    %p180 = pneg %p174
    %p181 = scmp.eq.s32.totalorder %s13, 3
    %p182 = por %p180, %p181
    %p183 = scmp.ne.s32.totalorder %s175, %s178
    %p184 = scmp.eq.s32.totalorder %s13, 0
    %p185 = por %p183, %p184
    %p186 = scmp.ne.s32.totalorder %s175, %s178
    %p187 = scmp.eq.s32.totalorder %s18, 3
    %p188 = por %p186, %p187
    %p189 = scmp.ne.s32.totalorder %s178, %s179
    %p190 = scmp.eq.s32.totalorder %s18, 0
    %p191 = por %p189, %p190
    %p192 = scmp.ne.s32.totalorder %s178, %s179
    %p193 = scmp.eq.s32.totalorder %s19, 3
    %p194 = por %p192, %p193
    %p196 = scmp.ne.s32.totalorder %s179, %s195
    %p197 = scmp.eq.s32.totalorder %s19, 0
    %p198 = por %p196, %p197
    %p199 = scmp.le.s32.totalorder 1, %s13
    %p200 = scmp.lt.s32.totalorder %s13, 5
    %p201 = pnand %p199, %p200
    %p202 = pneg %p201
    // Predicated region
    $region9: #{ppo_forward.1} parent=5 // pred_check
      _
    $region10: #{ppo_forward.1} parent=5 // pred_check_branch
      %204 = sbr.rel (%p201) target = $region12
    $region11: #{ppo_forward.1} parent=5 // pred_region
      %s205 = ssub.s32 %s13, 1
      // Predicated region
      $region13: #{ppo_forward.1} parent=11 // pred_check
        %p206 = pneg %p60
      $region14: #{ppo_forward.1} parent=11 // pred_check_branch
        %208 = sbr.rel (%p206) target = $region16
      $region15: #{ppo_forward.1} parent=11 // pred_region
        _
      $region16: #{ppo_forward.1} parent=11 // pred_fallthru
        _
      // Predicated region
      $region17: #{ppo_forward.1} parent=11 // pred_check
        %p209 = pneg %p81
      $region18: #{ppo_forward.1} parent=11 // pred_check_branch
        %211 = sbr.rel (%p209) target = $region20
      $region19: #{ppo_forward.1} parent=11 // pred_region
        _
      $region20: #{ppo_forward.1} parent=11 // pred_fallthru
        _
      // Predicated region
      $region21: #{ppo_forward.1} parent=11 // pred_check
        %p212 = pneg %p102
      $region22: #{ppo_forward.1} parent=11 // pred_check_branch
        %214 = sbr.rel (%p212) target = $region24
      $region23: #{ppo_forward.1} parent=11 // pred_region
        _
      $region24: #{ppo_forward.1} parent=11 // pred_fallthru
        _
      // Predicated region
      $region25: #{ppo_forward.1} parent=11 // pred_check
        %p215 = pneg %p123
      $region26: #{ppo_forward.1} parent=11 // pred_check_branch
        %217 = sbr.rel (%p215) target = $region28
      $region27: #{ppo_forward.1} parent=11 // pred_region
        _
      $region28: #{ppo_forward.1} parent=11 // pred_fallthru
        _
      // Predicated region
      $region29: #{ppo_forward.1} parent=11 // pred_check
        %p218 = pneg %p144
      $region30: #{ppo_forward.1} parent=11 // pred_check_branch
        %220 = sbr.rel (%p218) target = $region32
      $region31: #{ppo_forward.1} parent=11 // pred_region
        _
      $region32: #{ppo_forward.1} parent=11 // pred_fallthru
        _
      // Predicated region
      $region33: #{ppo_forward.1} parent=11 // pred_check
        %p221 = pneg %p165
      $region34: #{ppo_forward.1} parent=11 // pred_check_branch
        %223 = sbr.rel (%p221) target = $region36
      $region35: #{ppo_forward.1} parent=11 // pred_region
        _
      $region36: #{ppo_forward.1} parent=11 // pred_fallthru
        _
    $region12: #{ppo_forward.1} parent=5 // pred_fallthru
      _
    %p224 = scmp.lt.s32.totalorder %s13, 4
    // Predicated region
    $region37: #{ppo_forward.1} parent=5 // pred_check
      %p225 = pneg %p224
    $region38: #{ppo_forward.1} parent=5 // pred_check_branch
      %227 = sbr.rel (%p225) target = $region40
    $region39: #{ppo_forward.1} parent=5 // pred_region
      // Predicated region
      $region41: #{ppo_forward.1} parent=39 // pred_check
        %p228 = pneg %p33
      $region42: #{ppo_forward.1} parent=39 // pred_check_branch
        %230 = sbr.rel (%p228) target = $region44
      $region43: #{ppo_forward.1} parent=39 // pred_region
        %s231 = smul.u32 4, %s13
        %p232 = scmp.lt.s32.totalorder %s231, 15
        %s233 = scalar_select %p232, %s231, 15
        %s234 = smul.addr %s233, 8
        %s235 = scalar_lea.vmem %s0, %s234
        %s236 = smul.u32 4, %s13
      $region44: #{ppo_forward.1} parent=39 // pred_fallthru
        _
    $region40: #{ppo_forward.1} parent=5 // pred_fallthru
      _
    %p237 = scmp.le.s32.totalorder 1, %s13
    %p238 = scmp.lt.s32.totalorder %s13, 5
    %p239 = pnand %p237, %p238
    %p240 = pneg %p239
    // Predicated region
    $region45: #{ppo_forward.1} parent=5 // pred_check
      _
    $region46: #{ppo_forward.1} parent=5 // pred_check_branch
      %242 = sbr.rel (%p239) target = $region48
    $region47: #{ppo_forward.1} parent=5 // pred_region
      %s243 = ssub.s32 %s13, 1
      %s244 = smul.u32 4, %s18
      %p245 = scmp.lt.s32.totalorder %s244, 15
      %s246 = scalar_select %p245, %s244, 15
      %s247 = smul.addr %s246, 8
      %s248 = scalar_lea.vmem %s0, %s247
      %p249 = pneg %p39
      %p250 = pneg %p36
      %p251 = pneg %p60
      %p252 = pneg %p57
      %p253 = pneg %p81
      %p254 = pneg %p78
      %p255 = pneg %p102
      %p256 = pneg %p99
      %p257 = pneg %p123
      %p258 = pneg %p120
      %p259 = pneg %p144
      %p260 = pneg %p141
      %p261 = pneg %p165
      %p262 = pneg %p162
      %p263 = pneg %p191
      %p264 = pneg %p188
      %s265 = smul.u32 4, %s18
      %p266 = scmp.lt.s32.totalorder %s265, 15
      %s267 = scalar_select %p266, %s265, 15
      %s268 = smul.addr %s267, 8
      %s269 = scalar_lea.vmem %s7, %s268
      %s270 = smul.u32 4, %s18
      %p271 = scmp.lt.s32.totalorder %s270, 15
      %s272 = scalar_select %p271, %s270, 15
      %s273 = smul.addr %s272, 8
      %s274 = scalar_lea.vmem %s0, %s273
      %s275 = smul.u32 4, %s18
      %s276 = smul.u32 4, %s18
      %p277 = scmp.lt.s32.totalorder %s276, 15
      %s278 = scalar_select %p277, %s276, 15
      %s279 = smul.addr %s278, 8
      %s280 = scalar_lea.vmem %s7, %s279
      %s281 = smul.u32 4, %s18
      %v282 = vld [vmem:[%s1] sm:$0xff]
      %v283 = vld [vmem:[%s1 + $0x8] sm:$0xff]
      %v284 = vld [vmem:[%s1 + $0x10] sm:$0xff]
      %v285 = vld [vmem:[%s1 + $0x18] sm:$0xff]
      %v286 = vld [vmem:[%s2] sm:$0x1]
      %v288 = vlaneseq
      %v289 = vshrl.u32 %v288, 7
      %v290 = vsub.s32 0, %v289
      %v291 = vrot.slane %v286, %v290
      %v293 = vld [vmem:[%s274] sm:$0xff]
      %v294 = vld [vmem:[%s274 + $0x8] sm:$0xff]
      %v295 = vld [vmem:[%s274 + $0x10] sm:$0xff]
      %v296 = vld [vmem:[%s274 + $0x18] sm:$0xff]
      %vm297 = vcmask 261120
      %v299 = vsel %vm297, %v293, 0
      %v302 = vsel %vm297, %v294, 0
      %v305 = vsel %vm297, %v295, 0
      %v308 = vsel %vm297, %v296, 0
      %310 = vmatprep.subr.mxu0 0.0
      %311 = vmatpush1.msra.mxu0 %v282
      %312 = vmatprep.subr.mxu0 0.0
      %313 = vmatpush1.msra.mxu0 %v283
      %314 = vmatprep.subr.mxu0 0.0
      %315 = vmatpush1.msra.mxu0 %v284
      %316 = vmatprep.subr.mxu0 0.0
      %317 = vmatpush1.msra.mxu0 %v285
      %318 = vmatprep.subr.mxu0 0.0
      %319 = vmatpush1.msra.mxu0 0.0
      %320 = vmatprep.subr.mxu0 0.0
      %321 = vmatpush1.msra.mxu0 0.0
      %322 = vmatprep.subr.mxu0 0.0
      %323 = vmatpush1.msra.mxu0 0.0
      %324 = vmatprep.subr.mxu0 0.0
      %325 = vmatpush1.msra.mxu0 0.0
      %326 = vmatprep.subr.mxu0 0.0
      %327 = vmatpush1.msra.mxu0 0.0
      %328 = vmatprep.subr.mxu0 0.0
      %329 = vmatpush1.msra.mxu0 0.0
      %330 = vmatprep.subr.mxu0 0.0
      %331 = vmatpush1.msra.mxu0 0.0
      %332 = vmatprep.subr.mxu0 0.0
      %333 = vmatpush1.msra.mxu0 0.0
      %334 = vmatprep.subr.mxu0 0.0
      %335 = vmatpush1.msra.mxu0 0.0
      %336 = vmatprep.subr.mxu0 0.0
      %337 = vmatpush1.msra.mxu0 0.0
      %338 = vmatprep.subr.mxu0 0.0
      %339 = vmatpush1.msra.mxu0 0.0
      %340 = vmatprep.subr.mxu0 0.0
      %341 = vmatpush1.msra.mxu0 0.0
      %342 = vmatprep.subr.mxu0 0.0
      %343 = vmatpush1.msra.mxu0 0.0
      %344 = vmatprep.subr.mxu0 0.0
      %345 = vmatpush1.msra.mxu0 0.0
      %346 = vmatprep.subr.mxu0 0.0
      %347 = vmatpush1.msra.mxu0 0.0
      %348 = vmatprep.subr.mxu0 0.0
      %349 = vmatpush1.msra.mxu0 0.0
      %350 = vmatprep.subr.mxu0 0.0
      %351 = vmatpush1.msra.mxu0 0.0
      %352 = vmatprep.subr.mxu0 0.0
      %353 = vmatpush1.msra.mxu0 0.0
      %354 = vmatprep.subr.mxu0 0.0
      %355 = vmatpush1.msra.mxu0 0.0
      %356 = vmatprep.subr.mxu0 0.0
      %357 = vmatpush1.msra.mxu0 0.0
      %358 = vmatprep.subr.mxu0 0.0
      %359 = vmatpush1.msra.mxu0 0.0
      %360 = vmatprep.subr.mxu0 0.0
      %361 = vmatpush1.msra.mxu0 0.0
      %362 = vmatprep.subr.mxu0 0.0
      %363 = vmatpush1.msra.mxu0 0.0
      %364 = vmatprep.subr.mxu0 0.0
      %365 = vmatpush1.msra.mxu0 0.0
      %366 = vmatprep.subr.mxu0 0.0
      %367 = vmatpush1.msra.mxu0 0.0
      %368 = vmatprep.subr.mxu0 0.0
      %369 = vmatpush1.msra.mxu0 0.0
      %370 = vmatprep.subr.mxu0 0.0
      %371 = vmatpush1.msra.mxu0 0.0
      %372 = vmatprep.subr.mxu0 0.0
      %373 = vmatpush1.msra.mxu0 0.0
      %374 = vmatprep.mubr.f32.mxu0 0.0
      %375 = vmatmul.mubr.f32.gmra.mrb[0].mxu0 %v299
      %v376 = vpop.f32.mrb[0].mxu0
      %v377 = vadd.f32 %v291, %v376
      %v378 = vpop.f32.mrb[0].mxu0
      %379 = vmatprep.mubr.f32.mxu0 0.0
      %380 = vmatmul.mubr.f32.gmra.mrb[0].mxu0 %v302
      %v381 = vpop.f32.mrb[0].mxu0
      %v382 = vadd.f32 %v291, %v381
      %v383 = vpop.f32.mrb[0].mxu0
      %384 = vmatprep.mubr.f32.mxu0 0.0
      %385 = vmatmul.mubr.f32.gmra.mrb[0].mxu0 %v305
      %v386 = vpop.f32.mrb[0].mxu0
      %v387 = vadd.f32 %v291, %v386
      %v388 = vpop.f32.mrb[0].mxu0
      %389 = vmatprep.mubr.f32.mxu0 0.0
      %390 = vmatmul.mubr.f32.gmra.mrb[0].mxu0 %v308
      %v391 = vpop.f32.mrb[0].mxu0
      %v392 = vadd.f32 %v291, %v391
      %v393 = vpop.f32.mrb[0].mxu0
      %394 = vdwg.mxu0
      %v395 = vmax.f32 %v377, 0.0
      %v396 = vmax.f32 %v382, 0.0
      %v397 = vmax.f32 %v387, 0.0
      %v398 = vmax.f32 %v392, 0.0
      %v400 = vsel %vm297, %v395, 0
      %v403 = vsel %vm297, %v396, 0
      %v406 = vsel %vm297, %v397, 0
      %v409 = vsel %vm297, %v398, 0
      %411 = vmatprep.subr.mxu0 0.0
      %412 = vmatpush1.msra.mxu0 %v282
      %413 = vmatprep.subr.mxu0 0.0
      %414 = vmatpush1.msra.mxu0 %v283
      %415 = vmatprep.subr.mxu0 0.0
      %416 = vmatpush1.msra.mxu0 %v284
      %417 = vmatprep.subr.mxu0 0.0
      %418 = vmatpush1.msra.mxu0 %v285
      %419 = vmatprep.subr.mxu0 0.0
      %420 = vmatpush1.msra.mxu0 0.0
      %421 = vmatprep.subr.mxu0 0.0
      %422 = vmatpush1.msra.mxu0 0.0
      %423 = vmatprep.subr.mxu0 0.0
      %424 = vmatpush1.msra.mxu0 0.0
      %425 = vmatprep.subr.mxu0 0.0
      %426 = vmatpush1.msra.mxu0 0.0
      %427 = vmatprep.subr.mxu0 0.0
      %428 = vmatpush1.msra.mxu0 0.0
      %429 = vmatprep.subr.mxu0 0.0
      %430 = vmatpush1.msra.mxu0 0.0
      %431 = vmatprep.subr.mxu0 0.0
      %432 = vmatpush1.msra.mxu0 0.0
      %433 = vmatprep.subr.mxu0 0.0
      %434 = vmatpush1.msra.mxu0 0.0
      %435 = vmatprep.subr.mxu0 0.0
      %436 = vmatpush1.msra.mxu0 0.0
      %437 = vmatprep.subr.mxu0 0.0
      %438 = vmatpush1.msra.mxu0 0.0
      %439 = vmatprep.subr.mxu0 0.0
      %440 = vmatpush1.msra.mxu0 0.0
      %441 = vmatprep.subr.mxu0 0.0
      %442 = vmatpush1.msra.mxu0 0.0
      %443 = vmatprep.subr.mxu0 0.0
      %444 = vmatpush1.msra.mxu0 0.0
      %445 = vmatprep.subr.mxu0 0.0
      %446 = vmatpush1.msra.mxu0 0.0
      %447 = vmatprep.subr.mxu0 0.0
      %448 = vmatpush1.msra.mxu0 0.0
      %449 = vmatprep.subr.mxu0 0.0
      %450 = vmatpush1.msra.mxu0 0.0
      %451 = vmatprep.subr.mxu0 0.0
      %452 = vmatpush1.msra.mxu0 0.0
      %453 = vmatprep.subr.mxu0 0.0
      %454 = vmatpush1.msra.mxu0 0.0
      %455 = vmatprep.subr.mxu0 0.0
      %456 = vmatpush1.msra.mxu0 0.0
      %457 = vmatprep.subr.mxu0 0.0
      %458 = vmatpush1.msra.mxu0 0.0
      %459 = vmatprep.subr.mxu0 0.0
      %460 = vmatpush1.msra.mxu0 0.0
      %461 = vmatprep.subr.mxu0 0.0
      %462 = vmatpush1.msra.mxu0 0.0
      %463 = vmatprep.subr.mxu0 0.0
      %464 = vmatpush1.msra.mxu0 0.0
      %465 = vmatprep.subr.mxu0 0.0
      %466 = vmatpush1.msra.mxu0 0.0
      %467 = vmatprep.subr.mxu0 0.0
      %468 = vmatpush1.msra.mxu0 0.0
      %469 = vmatprep.subr.mxu0 0.0
      %470 = vmatpush1.msra.mxu0 0.0
      %471 = vmatprep.subr.mxu0 0.0
      %472 = vmatpush1.msra.mxu0 0.0
      %473 = vmatprep.subr.mxu0 0.0
      %474 = vmatpush1.msra.mxu0 0.0
      %475 = vmatprep.mubr.f32.mxu0 0.0
      %476 = vmatmul.mubr.f32.gmra.mrb[0].mxu0 %v400
      %v477 = vpop.f32.mrb[0].mxu0
      %v478 = vadd.f32 %v291, %v477
      %v479 = vpop.f32.mrb[0].mxu0
      %480 = vmatprep.mubr.f32.mxu0 0.0
      %481 = vmatmul.mubr.f32.gmra.mrb[0].mxu0 %v403
      %v482 = vpop.f32.mrb[0].mxu0
      %v483 = vadd.f32 %v291, %v482
      %v484 = vpop.f32.mrb[0].mxu0
      %485 = vmatprep.mubr.f32.mxu0 0.0
      %486 = vmatmul.mubr.f32.gmra.mrb[0].mxu0 %v406
      %v487 = vpop.f32.mrb[0].mxu0
      %v488 = vadd.f32 %v291, %v487
      %v489 = vpop.f32.mrb[0].mxu0
      %490 = vmatprep.mubr.f32.mxu0 0.0
      %491 = vmatmul.mubr.f32.gmra.mrb[0].mxu0 %v409
      %v492 = vpop.f32.mrb[0].mxu0
      %v493 = vadd.f32 %v291, %v492
      %v494 = vpop.f32.mrb[0].mxu0
      %495 = vdwg.mxu0
      %v496 = vmax.f32 %v478, 0.0
      %v497 = vmax.f32 %v483, 0.0
      %v498 = vmax.f32 %v488, 0.0
      %v499 = vmax.f32 %v493, 0.0
      %v500 = vld [vmem:[%s3] sm:$0xff]
      %v501 = vld [vmem:[%s3 + $0x8] sm:$0xff]
      %v502 = vld [vmem:[%s3 + $0x10] sm:$0xff]
      %v503 = vld [vmem:[%s3 + $0x18] sm:$0xff]
      %v504 = vld [vmem:[%s4] sm:$0x1]
      %v506 = vlaneseq
      %v507 = vshrl.u32 %v506, 7
      %v508 = vsub.s32 0, %v507
      %v509 = vrot.slane %v504, %v508
      %v512 = vsel %vm297, %v496, 0
      %v515 = vsel %vm297, %v497, 0
      %v518 = vsel %vm297, %v498, 0
      %v521 = vsel %vm297, %v499, 0
      %523 = vmatprep.subr.mxu0 0.0
      %524 = vmatpush1.msra.mxu0 %v500
      %525 = vmatprep.subr.mxu0 0.0
      %526 = vmatpush1.msra.mxu0 %v501
      %527 = vmatprep.subr.mxu0 0.0
      %528 = vmatpush1.msra.mxu0 %v502
      %529 = vmatprep.subr.mxu0 0.0
      %530 = vmatpush1.msra.mxu0 %v503
      %531 = vmatprep.subr.mxu0 0.0
      %532 = vmatpush1.msra.mxu0 0.0
      %533 = vmatprep.subr.mxu0 0.0
      %534 = vmatpush1.msra.mxu0 0.0
      %535 = vmatprep.subr.mxu0 0.0
      %536 = vmatpush1.msra.mxu0 0.0
      %537 = vmatprep.subr.mxu0 0.0
      %538 = vmatpush1.msra.mxu0 0.0
      %539 = vmatprep.subr.mxu0 0.0
      %540 = vmatpush1.msra.mxu0 0.0
      %541 = vmatprep.subr.mxu0 0.0
      %542 = vmatpush1.msra.mxu0 0.0
      %543 = vmatprep.subr.mxu0 0.0
      %544 = vmatpush1.msra.mxu0 0.0
      %545 = vmatprep.subr.mxu0 0.0
      %546 = vmatpush1.msra.mxu0 0.0
      %547 = vmatprep.subr.mxu0 0.0
      %548 = vmatpush1.msra.mxu0 0.0
      %549 = vmatprep.subr.mxu0 0.0
      %550 = vmatpush1.msra.mxu0 0.0
      %551 = vmatprep.subr.mxu0 0.0
      %552 = vmatpush1.msra.mxu0 0.0
      %553 = vmatprep.subr.mxu0 0.0
      %554 = vmatpush1.msra.mxu0 0.0
      %555 = vmatprep.subr.mxu0 0.0
      %556 = vmatpush1.msra.mxu0 0.0
      %557 = vmatprep.subr.mxu0 0.0
      %558 = vmatpush1.msra.mxu0 0.0
      %559 = vmatprep.subr.mxu0 0.0
      %560 = vmatpush1.msra.mxu0 0.0
      %561 = vmatprep.subr.mxu0 0.0
      %562 = vmatpush1.msra.mxu0 0.0
      %563 = vmatprep.subr.mxu0 0.0
      %564 = vmatpush1.msra.mxu0 0.0
      %565 = vmatprep.subr.mxu0 0.0
      %566 = vmatpush1.msra.mxu0 0.0
      %567 = vmatprep.subr.mxu0 0.0
      %568 = vmatpush1.msra.mxu0 0.0
      %569 = vmatprep.subr.mxu0 0.0
      %570 = vmatpush1.msra.mxu0 0.0
      %571 = vmatprep.subr.mxu0 0.0
      %572 = vmatpush1.msra.mxu0 0.0
      %573 = vmatprep.subr.mxu0 0.0
      %574 = vmatpush1.msra.mxu0 0.0
      %575 = vmatprep.subr.mxu0 0.0
      %576 = vmatpush1.msra.mxu0 0.0
      %577 = vmatprep.subr.mxu0 0.0
      %578 = vmatpush1.msra.mxu0 0.0
      %579 = vmatprep.subr.mxu0 0.0
      %580 = vmatpush1.msra.mxu0 0.0
      %581 = vmatprep.subr.mxu0 0.0
      %582 = vmatpush1.msra.mxu0 0.0
      %583 = vmatprep.subr.mxu0 0.0
      %584 = vmatpush1.msra.mxu0 0.0
      %585 = vmatprep.subr.mxu0 0.0
      %586 = vmatpush1.msra.mxu0 0.0
      %587 = vmatprep.mubr.f32.mxu0 0.0
      %588 = vmatmul.mubr.f32.gmra.mrb[0].mxu0 %v512
      %v589 = vpop.f32.mrb[0].mxu0
      %v590 = vadd.f32 %v509, %v589
      %v591 = vpop.f32.mrb[0].mxu0
      %592 = vmatprep.mubr.f32.mxu0 0.0
      %593 = vmatmul.mubr.f32.gmra.mrb[0].mxu0 %v515
      %v594 = vpop.f32.mrb[0].mxu0
      %v595 = vadd.f32 %v509, %v594
      %v596 = vpop.f32.mrb[0].mxu0
      %597 = vmatprep.mubr.f32.mxu0 0.0
      %598 = vmatmul.mubr.f32.gmra.mrb[0].mxu0 %v518
      %v599 = vpop.f32.mrb[0].mxu0
      %v600 = vadd.f32 %v509, %v599
      %v601 = vpop.f32.mrb[0].mxu0
      %602 = vmatprep.mubr.f32.mxu0 0.0
      %603 = vmatmul.mubr.f32.gmra.mrb[0].mxu0 %v521
      %v604 = vpop.f32.mrb[0].mxu0
      %v605 = vadd.f32 %v509, %v604
      %v606 = vpop.f32.mrb[0].mxu0
      %607 = vdwg.mxu0
      %v608 = vmax.f32 %v590, 0.0
      %v609 = vmax.f32 %v595, 0.0
      %v610 = vmax.f32 %v600, 0.0
      %v611 = vmax.f32 %v605, 0.0
      %v612 = vld [vmem:[%s5] sm:$0xff]
      %v613 = vld [vmem:[%s5 + $0x8] sm:$0xff]
      %v614 = vld [vmem:[%s5 + $0x10] sm:$0xff]
      %v615 = vld [vmem:[%s5 + $0x18] sm:$0xff]
      %v616 = vld [vmem:[%s6] sm:$0x1]
      %v618 = vlaneseq
      %v619 = vshrl.u32 %v618, 7
      %v620 = vsub.s32 0, %v619
      %v621 = vrot.slane %v616, %v620
      %v624 = vsel %vm297, %v608, 0
      %v627 = vsel %vm297, %v609, 0
      %v630 = vsel %vm297, %v610, 0
      %v633 = vsel %vm297, %v611, 0
      %635 = vmatprep.subr.mxu0 0.0
      %636 = vmatpush1.msra.mxu0 %v612
      %637 = vmatprep.subr.mxu0 0.0
      %638 = vmatpush1.msra.mxu0 %v613
      %639 = vmatprep.subr.mxu0 0.0
      %640 = vmatpush1.msra.mxu0 %v614
      %641 = vmatprep.subr.mxu0 0.0
      %642 = vmatpush1.msra.mxu0 %v615
      %643 = vmatprep.subr.mxu0 0.0
      %644 = vmatpush1.msra.mxu0 0.0
      %645 = vmatprep.subr.mxu0 0.0
      %646 = vmatpush1.msra.mxu0 0.0
      %647 = vmatprep.subr.mxu0 0.0
      %648 = vmatpush1.msra.mxu0 0.0
      %649 = vmatprep.subr.mxu0 0.0
      %650 = vmatpush1.msra.mxu0 0.0
      %651 = vmatprep.subr.mxu0 0.0
      %652 = vmatpush1.msra.mxu0 0.0
      %653 = vmatprep.subr.mxu0 0.0
      %654 = vmatpush1.msra.mxu0 0.0
      %655 = vmatprep.subr.mxu0 0.0
      %656 = vmatpush1.msra.mxu0 0.0
      %657 = vmatprep.subr.mxu0 0.0
      %658 = vmatpush1.msra.mxu0 0.0
      %659 = vmatprep.subr.mxu0 0.0
      %660 = vmatpush1.msra.mxu0 0.0
      %661 = vmatprep.subr.mxu0 0.0
      %662 = vmatpush1.msra.mxu0 0.0
      %663 = vmatprep.subr.mxu0 0.0
      %664 = vmatpush1.msra.mxu0 0.0
      %665 = vmatprep.subr.mxu0 0.0
      %666 = vmatpush1.msra.mxu0 0.0
      %667 = vmatprep.subr.mxu0 0.0
      %668 = vmatpush1.msra.mxu0 0.0
      %669 = vmatprep.subr.mxu0 0.0
      %670 = vmatpush1.msra.mxu0 0.0
      %671 = vmatprep.subr.mxu0 0.0
      %672 = vmatpush1.msra.mxu0 0.0
      %673 = vmatprep.subr.mxu0 0.0
      %674 = vmatpush1.msra.mxu0 0.0
      %675 = vmatprep.subr.mxu0 0.0
      %676 = vmatpush1.msra.mxu0 0.0
      %677 = vmatprep.subr.mxu0 0.0
      %678 = vmatpush1.msra.mxu0 0.0
      %679 = vmatprep.subr.mxu0 0.0
      %680 = vmatpush1.msra.mxu0 0.0
      %681 = vmatprep.subr.mxu0 0.0
      %682 = vmatpush1.msra.mxu0 0.0
      %683 = vmatprep.subr.mxu0 0.0
      %684 = vmatpush1.msra.mxu0 0.0
      %685 = vmatprep.subr.mxu0 0.0
      %686 = vmatpush1.msra.mxu0 0.0
      %687 = vmatprep.subr.mxu0 0.0
      %688 = vmatpush1.msra.mxu0 0.0
      %689 = vmatprep.subr.mxu0 0.0
      %690 = vmatpush1.msra.mxu0 0.0
      %691 = vmatprep.subr.mxu0 0.0
      %692 = vmatpush1.msra.mxu0 0.0
      %693 = vmatprep.subr.mxu0 0.0
      %694 = vmatpush1.msra.mxu0 0.0
      %695 = vmatprep.subr.mxu0 0.0
      %696 = vmatpush1.msra.mxu0 0.0
      %697 = vmatprep.subr.mxu0 0.0
      %698 = vmatpush1.msra.mxu0 0.0
      %699 = vmatprep.mubr.f32.mxu0 0.0
      %700 = vmatmul.mubr.f32.gmra.mrb[0].mxu0 %v624
      %v701 = vpop.f32.mrb[0].mxu0
      %v702 = vadd.f32 %v621, %v701
      %v703 = vpop.f32.mrb[0].mxu0
      %704 = vmatprep.mubr.f32.mxu0 0.0
      %705 = vmatmul.mubr.f32.gmra.mrb[0].mxu0 %v627
      %v706 = vpop.f32.mrb[0].mxu0
      %v707 = vadd.f32 %v621, %v706
      %v708 = vpop.f32.mrb[0].mxu0
      %709 = vmatprep.mubr.f32.mxu0 0.0
      %710 = vmatmul.mubr.f32.gmra.mrb[0].mxu0 %v630
      %v711 = vpop.f32.mrb[0].mxu0
      %v712 = vadd.f32 %v621, %v711
      %v713 = vpop.f32.mrb[0].mxu0
      %714 = vmatprep.mubr.f32.mxu0 0.0
      %715 = vmatmul.mubr.f32.gmra.mrb[0].mxu0 %v633
      %v716 = vpop.f32.mrb[0].mxu0
      %v717 = vadd.f32 %v621, %v716
      %v718 = vpop.f32.mrb[0].mxu0
      %719 = vdwg.mxu0
      %vm720 = vcmask 64512
      %721 = vst.msk [vmem:[%s280] sm:$0xff] %vm720, %v702
      %722 = vst.msk [vmem:[%s280 + $0x8] sm:$0xff] %vm720, %v707
      %723 = vst.msk [vmem:[%s280 + $0x10] sm:$0xff] %vm720, %v712
      %724 = vst.msk [vmem:[%s280 + $0x18] sm:$0xff] %vm720, %v717
      %s725 = smul.u32 4, %s18
      %p726 = scmp.lt.s32.totalorder %s725, 15
      %s727 = scalar_select %p726, %s725, 15
      %s728 = smul.addr %s727, 8
      %s729 = scalar_lea.vmem %s7, %s728
      // Predicated region
      $region49: #{ppo_forward.1} parent=47 // pred_check
        %p730 = pneg %p188
      $region50: #{ppo_forward.1} parent=47 // pred_check_branch
        %732 = sbr.rel (%p730) target = $region52
      $region51: #{ppo_forward.1} parent=47 // pred_region
        %s733 = smul.u32 4, %s18
      $region52: #{ppo_forward.1} parent=47 // pred_fallthru
        _
    $region48: #{ppo_forward.1} parent=5 // pred_fallthru
      _
    %p734 = scmp.le.s32.totalorder 2, %s13
    // Predicated region
    $region53: #{ppo_forward.1} parent=5 // pred_check
      %p735 = pneg %p734
    $region54: #{ppo_forward.1} parent=5 // pred_check_branch
      %737 = sbr.rel (%p735) target = $region56
    $region55: #{ppo_forward.1} parent=5 // pred_region
      %s738 = ssub.s32 %s13, 2
      // Predicated region
      $region57: #{ppo_forward.1} parent=55 // pred_check
        %p739 = pneg %p194
      $region58: #{ppo_forward.1} parent=55 // pred_check_branch
        %741 = sbr.rel (%p739) target = $region60
      $region59: #{ppo_forward.1} parent=55 // pred_region
        %s742 = smul.u32 4, %s19
        %p743 = scmp.lt.s32.totalorder %s742, 15
        %s744 = scalar_select %p743, %s742, 15
        %s745 = smul.addr %s744, 8
        %s746 = scalar_lea.vmem %s7, %s745
      $region60: #{ppo_forward.1} parent=55 // pred_fallthru
        _
    $region56: #{ppo_forward.1} parent=5 // pred_fallthru
      _
  $region6: #{ppo_forward.1} parent=0 // loop_footer
    %s17 = sadd.s32 1, %s13
  $region7: #{ppo_forward.1} parent=0 // loop_footer_branch
    %12 = sbr.rel target = $region3
  $region8: #{ppo_forward.1} parent=0 // loop_exit
    _

</llo_original>
